<compile_context>
chip_gen: v5e
topology: v5e:2x2
jax: 0.10.0
libtpu: 0.0.40
codegen_flags: <defaults>
</compile_context>

<pallas_src>
import jax
import jax.numpy as jnp
from jax.experimental import pallas as pl
from jax.experimental.pallas import tpu as pltpu


def _round_up(x, m):
    return ((x + m - 1) // m) * m


def _cdiv(a, b):
    return (a + b - 1) // b


def _padded_block_bytes(shape, dtype):
    """Bytes of a 2-D VMEM block after (sublane, 128)-lane padding."""
    itemsize = jnp.dtype(dtype).itemsize
    sub = 8 * (4 // itemsize)          # f32 -> 8, bf16 -> 16 sublanes per vreg
    r, c = shape
    return _round_up(r, sub) * _round_up(c, 128) * itemsize


def _vmem_capacity_bytes():
    try:
        return int(pltpu.get_tpu_info().vmem_capacity_bytes)
    except Exception:
        return 64 << 20                # conservative default (v7x per-core)


def tower_kernel(x_ref, w1t_ref, b1_ref, w2_ref, b2_ref, o_ref, acc_ref):
    # x_ref  : (tm, 2*dim) f32  row tile of emb (resident across j)
    # w1t_ref: (2*dim, tn) bf16 slab of W1.T
    # b1_ref : (1, tn)     f32  bias1 slab
    # w2_ref : (1, tn)     f32  matching slice of W2 as a lane-dense row
    # b2_ref : (1, 1)      f32  bias2
    # o_ref  : (tm, 1)          output tile (written on last j)
    # acc_ref: (tm, 1)     f32  accumulator scratch (seeded with bias2)
    j = pl.program_id(1)

    @pl.when(j == 0)
    def _():
        acc_ref[...] = jnp.broadcast_to(b2_ref[...], acc_ref.shape)

    # Layer 1 on the MXU in bf16, f32 accumulation; ReLU on the VPU.
    h = jnp.dot(x_ref[...].astype(jnp.bfloat16), w1t_ref[...],
                preferred_element_type=jnp.float32)
    h = jnp.maximum(h + b1_ref[...], 0.0)

    # Layer 2: VPU multiply + XLU lane reduction (keeps the MXU free, stays f32).
    acc_ref[...] += jnp.sum(h * w2_ref[...], axis=-1, keepdims=True)

    @pl.when(j == pl.num_programs(1) - 1)
    def _():
        o_ref[...] = acc_ref[...].astype(o_ref.dtype)


def tower_forward(emb, w1t, b1, w2, b2, *, tm=None, tn=None):
    """emb: (B, 2*dim) f32; w1t: (2*dim, dim); b1: (dim,); w2: dim elems; b2: (1,)."""
    B, K = emb.shape
    K_w, dim = w1t.shape
    assert K == K_w, "emb feature dim must match W1.T rows"
    assert b1.size == dim and jnp.size(w2) == dim and jnp.size(b2) == 1

    w1t = w1t.astype(jnp.bfloat16)                       # MXU operand
    b1_2d = jnp.reshape(b1, (1, dim)).astype(jnp.float32)
    w2_2d = jnp.reshape(w2, (1, dim)).astype(jnp.float32)
    b2_2d = jnp.reshape(b2, (1, 1)).astype(jnp.float32)

    x_item = jnp.dtype(emb.dtype).itemsize
    budget = (_vmem_capacity_bytes() * 3) // 4           # 48 MiB v7x / 96 MiB v5e,v6e

    # ---- row tile: target ~2 MiB of emb per buffer, keep >=2 row tiles ----
    if tm is None:
        tm = max(8, min(2048, (2 << 20) // (K * x_item)))
        tm = min(tm, _round_up(_cdiv(B, 2), 8))
        tm = max(8, _round_up(tm, 8))
    if tm >= B:
        tm = B                                            # full-extent block is legal
    n_rows = _cdiv(B, tm)

    # ---- hidden tile: keep all of W1.T resident whenever it fits the budget ----
    def footprint(tn_):
        return (2 * _padded_block_bytes((tm, K), emb.dtype)        # emb tile
                + 2 * _padded_block_bytes((K, tn_), w1t.dtype)     # W1.T slab
                + 2 * _padded_block_bytes((1, tn_), jnp.float32)   # bias1 slab
                + 2 * _padded_block_bytes((1, tn_), jnp.float32)   # W2 row slab
                + 2 * _padded_block_bytes((1, 1), jnp.float32)     # bias2
                + 2 * _padded_block_bytes((tm, 1), emb.dtype)      # output tile
                + _padded_block_bytes((tm, 1), jnp.float32))       # accumulator

    if tn is None:
        tn = dim
        if footprint(dim) > budget:
            cands = [t for t in range(128, dim, 128)
                     if dim % t == 0 and footprint(t) <= budget]
            if cands:
                tn = max(cands)
    assert dim % tn == 0, "hidden dim must be divisible by tn"
    n_hidden = dim // tn

    vmem_needed = footprint(tn)
    vmem_limit = int(min(budget, max(2 * vmem_needed, vmem_needed + (4 << 20))))

    out = pl.pallas_call(
        tower_kernel,
        out_shape=jax.ShapeDtypeStruct((B, 1), emb.dtype),
        grid_spec=pltpu.PrefetchScalarGridSpec(
            num_scalar_prefetch=0,
            grid=(n_rows, n_hidden),
            in_specs=[
                pl.BlockSpec((tm, K), lambda i, j: (i, 0)),   # emb rows
                pl.BlockSpec((K, tn), lambda i, j: (0, j)),   # W1.T slab (bf16)
                pl.BlockSpec((1, tn), lambda i, j: (0, j)),   # bias1 slab
                pl.BlockSpec((1, tn), lambda i, j: (0, j)),   # W2 row slab
                pl.BlockSpec((1, 1), lambda i, j: (0, 0)),    # bias2
            ],
            out_specs=pl.BlockSpec((tm, 1), lambda i, j: (i, 0)),
            scratch_shapes=[pltpu.VMEM((tm, 1), jnp.float32)],
        ),
        compiler_params=pltpu.CompilerParams(
            dimension_semantics=("parallel", "arbitrary"),
            vmem_limit_bytes=vmem_limit,
        ),
    )(emb, w1t, b1_2d, w2_2d, b2_2d)

    return out


def init_tower_params(key, dim):
    """Matches PyTorch Tower init (xavier_uniform_ weights, default Linear bias
    init U(-1/sqrt(fan_in), 1/sqrt(fan_in))). W1 is returned pre-transposed and
    cast to bf16 (MXU operand); W2 is returned as a lane-dense (1, dim) f32 row."""
    k1w, k1b, k2w, k2b = jax.random.split(key, 4)

    in1, out1 = 2 * dim, dim
    bw1 = jnp.sqrt(6.0 / (in1 + out1))
    w1 = jax.random.uniform(k1w, (out1, in1), jnp.float32, -bw1, bw1)
    bb1 = 1.0 / jnp.sqrt(in1)
    b1 = jax.random.uniform(k1b, (out1,), jnp.float32, -bb1, bb1)

    in2, out2 = dim, 1
    bw2 = jnp.sqrt(6.0 / (in2 + out2))
    w2 = jax.random.uniform(k2w, (out2, in2), jnp.float32, -bw2, bw2)
    bb2 = 1.0 / jnp.sqrt(in2)
    b2 = jax.random.uniform(k2b, (out2,), jnp.float32, -bb2, bb2)

    w1t = w1.T.astype(jnp.bfloat16)        # (2*dim, dim) bf16
    w2_row = w2.reshape(1, dim)            # (1, dim) f32
    return w1t, b1, w2_row, b2             # b1: (dim,), b2: (1,)


if __name__ == "__main__":
    key = jax.random.PRNGKey(0)
    k_param, k_x = jax.random.split(key)

    batch, dim = 16, 128
    w1t, b1, w2_row, b2 = init_tower_params(k_param, dim)
    emb = jax.random.normal(k_x, (batch, 2 * dim), jnp.float32)

    out = jax.block_until_ready(tower_forward(emb, w1t, b1, w2_row, b2))

    # Reference with the same bf16 layer-1 operands / f32 accumulation.
    h_ref = jnp.maximum(
        jnp.dot(emb.astype(jnp.bfloat16), w1t,
                preferred_element_type=jnp.float32) + b1, 0.0)
    ref = jnp.sum(h_ref * w2_row, axis=-1, keepdims=True) + b2

    assert out.shape == (batch, 1)
    assert jnp.allclose(out, ref, atol=1e-3, rtol=1e-3), \
        float(jnp.max(jnp.abs(out - ref)))

    print("KERNEL_OK")
</pallas_src>

<mosaic_0001>
module attributes {stable_mosaic.version = 11 : i64} {
  func.func @tower_kernel(%arg0: i32, %arg1: i32, %arg2: memref<8x256xf32, #tpu.memory_space<vmem>>, %arg3: memref<256x128xbf16, #tpu.memory_space<vmem>>, %arg4: memref<1x128xf32, #tpu.memory_space<vmem>>, %arg5: memref<1x128xf32, #tpu.memory_space<vmem>>, %arg6: memref<1x1xf32, #tpu.memory_space<vmem>>, %arg7: memref<8x1xf32, #tpu.memory_space<vmem>>, %arg8: memref<8x1xf32, #tpu.memory_space<vmem>>) attributes {dimension_semantics = [#tpu.dimension_semantics<parallel>, #tpu.dimension_semantics<arbitrary>], iteration_bounds = array<i64: 2, 1>, scalar_prefetch = 0 : i64, scratch_operands = 1 : i64, tpu.core_type = #tpu.core_type<tc>, window_params = [{transform_indices = @transform_0, window_bounds = array<i64: 8, 256>}, {transform_indices = @transform_1, window_bounds = array<i64: 256, 128>}, {transform_indices = @transform_2, window_bounds = array<i64: 1, 128>}, {transform_indices = @transform_3, window_bounds = array<i64: 1, 128>}, {pipeline_mode = #tpu.pipeline_mode<synchronous>, transform_indices = @transform_4, window_bounds = array<i64: 1, 1>}, {transform_indices = @transform_5, window_bounds = array<i64: 8, 1>}]} {
    %c0_i32 = arith.constant 0 : i32
    %0 = arith.cmpi eq, %arg1, %c0_i32 : i32
    %1 = arith.extui %0 : i1 to i32
    %c0_i32_0 = arith.constant 0 : i32
    %2 = arith.cmpi ne, %1, %c0_i32_0 : i32
    scf.if %2 {
      %c0_16 = arith.constant 0 : index
      %c0_17 = arith.constant 0 : index
      %23 = vector.load %arg6[%c0_16, %c0_17] : memref<1x1xf32, #tpu.memory_space<vmem>>, vector<1x1xf32>
      %24 = vector.shape_cast %23 : vector<1x1xf32> to vector<1x1xf32>
      %25 = vector.broadcast %24 : vector<1x1xf32> to vector<8x1xf32>
      %c0_18 = arith.constant 0 : index
      %c0_19 = arith.constant 0 : index
      %26 = vector.load %arg8[%c0_18, %c0_19] : memref<8x1xf32, #tpu.memory_space<vmem>>, vector<8x1xf32>
      tpu.vector_store %arg8[%c0_18, %c0_19], %25 {strides = array<i32>} : memref<8x1xf32, #tpu.memory_space<vmem>>, vector<8x1xf32>,
    } else {
    }
    %c0 = arith.constant 0 : index
    %c0_1 = arith.constant 0 : index
    %3 = vector.load %arg2[%c0, %c0_1] : memref<8x256xf32, #tpu.memory_space<vmem>>, vector<8x256xf32>
    %4 = arith.truncf %3 : vector<8x256xf32> to vector<8x256xbf16>
    %c0_2 = arith.constant 0 : index
    %c0_3 = arith.constant 0 : index
    %5 = vector.load %arg3[%c0_2, %c0_3] : memref<256x128xbf16, #tpu.memory_space<vmem>>, vector<256x128xbf16>
    %cst = arith.constant dense<0.000000e+00> : vector<8x128xf32>
    %6 = tpu.matmul %4, %5, %cst {dimension_numbers = #tpu.dot_dimension_numbers<[1], [0], [0], [1], [0, 0, 1, 1], [], []>} : vector<8x256xbf16>, vector<256x128xbf16>, vector<8x128xf32> -> vector<8x128xf32>
    %c0_4 = arith.constant 0 : index
    %c0_5 = arith.constant 0 : index
    %7 = vector.load %arg4[%c0_4, %c0_5] : memref<1x128xf32, #tpu.memory_space<vmem>>, vector<1x128xf32>
    %8 = vector.broadcast %7 : vector<1x128xf32> to vector<8x128xf32>
    %9 = arith.addf %6, %8 : vector<8x128xf32>
    %cst_6 = arith.constant 0.000000e+00 : f32
    %10 = vector.broadcast %cst_6 : f32 to vector<8x128xf32>
    %11 = arith.maximumf %9, %10 : vector<8x128xf32>
    %c0_7 = arith.constant 0 : index
    %c0_8 = arith.constant 0 : index
    %12 = vector.load %arg8[%c0_7, %c0_8] : memref<8x1xf32, #tpu.memory_space<vmem>>, vector<8x1xf32>
    %c0_9 = arith.constant 0 : index
    %c0_10 = arith.constant 0 : index
    %13 = vector.load %arg5[%c0_9, %c0_10] : memref<1x128xf32, #tpu.memory_space<vmem>>, vector<1x128xf32>
    %14 = vector.broadcast %13 : vector<1x128xf32> to vector<8x128xf32>
    %15 = arith.mulf %11, %14 : vector<8x128xf32>
    %cst_11 = arith.constant dense<0.000000e+00> : vector<8xf32>
    %16 = vector.multi_reduction <add>, %15, %cst_11 [1] : vector<8x128xf32> to vector<8xf32>
    %17 = vector.shape_cast %16 : vector<8xf32> to vector<8x1xf32>
    %18 = arith.addf %12, %17 : vector<8x1xf32>
    %c0_12 = arith.constant 0 : index
    %c0_13 = arith.constant 0 : index
    %19 = vector.load %arg8[%c0_12, %c0_13] : memref<8x1xf32, #tpu.memory_space<vmem>>, vector<8x1xf32>
    tpu.vector_store %arg8[%c0_12, %c0_13], %18 {strides = array<i32>} : memref<8x1xf32, #tpu.memory_space<vmem>>, vector<8x1xf32>,
    %c0_i32_14 = arith.constant 0 : i32
    %20 = arith.cmpi eq, %arg1, %c0_i32_14 : i32
    %21 = arith.extui %20 : i1 to i32
    %c0_i32_15 = arith.constant 0 : i32
    %22 = arith.cmpi ne, %21, %c0_i32_15 : i32
    scf.if %22 {
      %c0_16 = arith.constant 0 : index
      %c0_17 = arith.constant 0 : index
      %23 = vector.load %arg8[%c0_16, %c0_17] : memref<8x1xf32, #tpu.memory_space<vmem>>, vector<8x1xf32>
      %c0_18 = arith.constant 0 : index
      %c0_19 = arith.constant 0 : index
      %24 = vector.load %arg7[%c0_18, %c0_19] : memref<8x1xf32, #tpu.memory_space<vmem>>, vector<8x1xf32>
      tpu.vector_store %arg7[%c0_18, %c0_19], %23 {strides = array<i32>} : memref<8x1xf32, #tpu.memory_space<vmem>>, vector<8x1xf32>,
    } else {
    }
    return
  }
  func.func @transform_0(%arg0: i32, %arg1: i32) -> (i32, i32) {
    %c0_i32 = arith.constant 0 : i32
    %c0_i32_0 = arith.constant 0 : i32
    return %arg0, %c0_i32 : i32, i32
  }
  func.func @transform_1(%arg0: i32, %arg1: i32) -> (i32, i32) {
    %c0_i32 = arith.constant 0 : i32
    %c0_i32_0 = arith.constant 0 : i32
    return %c0_i32, %arg1 : i32, i32
  }
  func.func @transform_2(%arg0: i32, %arg1: i32) -> (i32, i32) {
    %c0_i32 = arith.constant 0 : i32
    %c0_i32_0 = arith.constant 0 : i32
    return %c0_i32, %arg1 : i32, i32
  }
  func.func @transform_3(%arg0: i32, %arg1: i32) -> (i32, i32) {
    %c0_i32 = arith.constant 0 : i32
    %c0_i32_0 = arith.constant 0 : i32
    return %c0_i32, %arg1 : i32, i32
  }
  func.func @transform_4(%arg0: i32, %arg1: i32) -> (i32, i32) {
    %c0_i32 = arith.constant 0 : i32
    %c0_i32_0 = arith.constant 0 : i32
    %c0_i32_1 = arith.constant 0 : i32
    return %c0_i32, %c0_i32_0 : i32, i32
  }
  func.func @transform_5(%arg0: i32, %arg1: i32) -> (i32, i32) {
    %c0_i32 = arith.constant 0 : i32
    %c0_i32_0 = arith.constant 0 : i32
    return %arg0, %c0_i32 : i32, i32
  }
}

</mosaic_0001>

<llo_original>
// kernel: tpu_custom_call.1
$region0: #{tpu_custom_call.1}
  #allocation0 [shape = 'u32[]', space=smem, size = 0x4, offset = 0x4, fixed_abs, tag = 'smem constant byte address 0x4 - core index']
  #allocation1 [shape = 'u32[72,128]{1,0:T(1,128)}', space=vmem, size = 0x9000, scoped, tag = 'internal scratch']
  #allocation2 [shape = 'f32[8,1]{1,0:T(8,128)}', space=vmem, size = 0x1000, scoped, tag = 'scratch operand']
  #allocation3 [shape = 'f32[1,1]{1,0:T(1,128)S(1)}', space=vmem, size = 0x200, scoped, tag = 'scoped memory for tpu_custom_call.1']
  %s0 = inlined_call_operand.hbm [shape: f32[16,256], index: 0, kind: input, shape index: {}]
  %s1 = inlined_call_operand.hbm [shape: bf16[256,128], index: 1, kind: input, shape index: {}]
  %s2 = inlined_call_operand.vmem [shape: f32[1,128], index: 2, kind: input, shape index: {}]
  %s3 = inlined_call_operand.vmem [shape: f32[1,128], index: 3, kind: input, shape index: {}]
  %s4 = inlined_call_operand.<no memory space> [shape: f32[1,1], index: 4, kind: input, shape index: {}]
  %s5 = inlined_call_operand.vmem [shape: f32[16,1], index: 5, kind: output, shape index: {}]
  %s6 = sld [smem:[#allocation0]]
  $region69: #{tpu_custom_call.1} parent=0
    _
  %s8 = ssub.s32 1, %s6
  %s9 = scalar_select 0, %s8, %s6
  %v10 = vstv %s4
  %11 = vst [vmem:[#allocation3] sm:$0x1] %v10
  $region1: #{tpu_custom_call.1} parent=0
    #allocation4 [shape = 'u8[16384]{0}', space=vmem, size = 0x4000, scoped, tag = 'input window, operand 0']
    #allocation5 [shape = 's32[2]{0}', space=sflag, size = 0x8, scoped, tag = 'scoped memory for tpu_custom_call.1']
    #allocation6 [shape = 'u8[65536]{0}', space=vmem, size = 0x10000, scoped, tag = 'input window, operand 1, single buffered']
    #allocation7 [shape = 's32[1]{0}', space=sflag, size = 0x4, scoped, tag = 'scoped memory for tpu_custom_call.1']
    %12 = vsyncpa [#allocation5], 0
    %s13 = scalar_lea.sflag [#allocation5], 1
    %14 = vsyncpa %s13, 0
    %15 = vsyncpa [#allocation7], 0
    loop: start=0, step=1, limit=4
    $region2: #{tpu_custom_call.1} parent=1 // loop_pre_header
      _
    $region3: #{tpu_custom_call.1} parent=1 // loop_header
      %s17 = sphi 0, %s21
      %p18 = scmp.ge.s32.totalorder %s17, 4
      %s24 = sphi 0, %s36
      %s25 = sphi 0, %s32
      %s26 = sphi 0, %s24
      %s27 = sphi 0, %s25
      %s28 = sphi 0, %s26
      %s29 = sphi 0, %s27
      %s39 = sphi 0, %s41
      %s42 = sphi 0, %s39
      %s43 = sphi 0, %s42
      %s59 = sphi 0, %s43
      %s65 = sphi 0, %s67
      %s68 = sphi 0, %s65
      %s69 = sphi 0, %s68
      %s85 = sphi 0, %s69
      %s91 = sphi 0, %s93
      %s94 = sphi 0, %s91
      %s95 = sphi 0, %s94
      %s111 = sphi 0, %s95
      %s117 = sphi 0, %s119
      %s120 = sphi 0, %s117
      %s121 = sphi 0, %s120
      %s137 = sphi 0, %s121
      %s141 = sphi 0, %s141
      %s143 = sphi 0, %s141
      %s144 = sphi 0, %s143
      %s158 = sphi 0, %s144
      %s164 = sphi 0, %s166
      %s167 = sphi 0, %s164
      %s168 = sphi 0, %s167
      %s184 = sphi 0, %s168
    $region4: #{tpu_custom_call.1} parent=1 // loop_header_branch
      %20 = sbr.rel (%p18) target = $region8
    $region5: #{tpu_custom_call.1} parent=1 // loop_body
      %s22 = ssub.s32 %s17, 1
      %s23 = ssub.s32 %s17, 2
      %s30 = sadd.s32 1, %s25
      %p31 = scmp.ge.s32.totalorder %s30, 1
      %s32 = scalar_select %p31, 0, %s30
      %s33 = sadd.s32 1, %s24
      %s34 = scalar_select %p31, %s33, %s24
      %p35 = scmp.ge.s32.totalorder %s34, 2
      %s36 = scalar_select %p35, 0, %s34
      %s37 = ssub.s32 %s24, %s36
      %p38 = scmp.eq.s32.totalorder %s37, 0
      %s40 = sadd.s32 %s39, 1
      %s41 = scalar_select %p38, %s39, %s40
      %p44 = pneg %p38
      %p45 = scmp.eq.s32.totalorder %s17, 1
      %p46 = por %p44, %p45
      %p47 = scmp.ne.s32.totalorder %s39, %s42
      %p48 = scmp.eq.s32.totalorder %s17, 0
      %p49 = por %p47, %p48
      %p50 = scmp.ne.s32.totalorder %s39, %s42
      %p51 = scmp.eq.s32.totalorder %s22, 1
      %p52 = por %p50, %p51
      %p53 = scmp.ne.s32.totalorder %s42, %s43
      %p54 = scmp.eq.s32.totalorder %s22, 0
      %p55 = por %p53, %p54
      %p56 = scmp.ne.s32.totalorder %s42, %s43
      %p57 = scmp.eq.s32.totalorder %s23, 1
      %p58 = por %p56, %p57
      %p60 = scmp.ne.s32.totalorder %s43, %s59
      %p61 = scmp.eq.s32.totalorder %s23, 0
      %p62 = por %p60, %p61
      %s63 = ssub.s32 %s25, %s32
      %p64 = scmp.eq.s32.totalorder %s63, 0
      %s66 = sadd.s32 %s65, 1
      %s67 = scalar_select %p64, %s65, %s66
      %p70 = pneg %p64
      %p71 = scmp.eq.s32.totalorder %s17, 1
      %p72 = por %p70, %p71
      %p73 = scmp.ne.s32.totalorder %s65, %s68
      %p74 = scmp.eq.s32.totalorder %s17, 0
      %p75 = por %p73, %p74
      %p76 = scmp.ne.s32.totalorder %s65, %s68
      %p77 = scmp.eq.s32.totalorder %s22, 1
      %p78 = por %p76, %p77
      %p79 = scmp.ne.s32.totalorder %s68, %s69
      %p80 = scmp.eq.s32.totalorder %s22, 0
      %p81 = por %p79, %p80
      %p82 = scmp.ne.s32.totalorder %s68, %s69
      %p83 = scmp.eq.s32.totalorder %s23, 1
      %p84 = por %p82, %p83
      %p86 = scmp.ne.s32.totalorder %s69, %s85
      %p87 = scmp.eq.s32.totalorder %s23, 0
      %p88 = por %p86, %p87
      %s89 = ssub.s32 %s25, %s32
      %p90 = scmp.eq.s32.totalorder %s89, 0
      %s92 = sadd.s32 %s91, 1
      %s93 = scalar_select %p90, %s91, %s92
      %p96 = pneg %p90
      %p97 = scmp.eq.s32.totalorder %s17, 1
      %p98 = por %p96, %p97
      %p99 = scmp.ne.s32.totalorder %s91, %s94
      %p100 = scmp.eq.s32.totalorder %s17, 0
      %p101 = por %p99, %p100
      %p102 = scmp.ne.s32.totalorder %s91, %s94
      %p103 = scmp.eq.s32.totalorder %s22, 1
      %p104 = por %p102, %p103
      %p105 = scmp.ne.s32.totalorder %s94, %s95
      %p106 = scmp.eq.s32.totalorder %s22, 0
      %p107 = por %p105, %p106
      %p108 = scmp.ne.s32.totalorder %s94, %s95
      %p109 = scmp.eq.s32.totalorder %s23, 1
      %p110 = por %p108, %p109
      %p112 = scmp.ne.s32.totalorder %s95, %s111
      %p113 = scmp.eq.s32.totalorder %s23, 0
      %p114 = por %p112, %p113
      %s115 = ssub.s32 %s25, %s32
      %p116 = scmp.eq.s32.totalorder %s115, 0
      %s118 = sadd.s32 %s117, 1
      %s119 = scalar_select %p116, %s117, %s118
      %p122 = pneg %p116
      %p123 = scmp.eq.s32.totalorder %s17, 1
      %p124 = por %p122, %p123
      %p125 = scmp.ne.s32.totalorder %s117, %s120
      %p126 = scmp.eq.s32.totalorder %s17, 0
      %p127 = por %p125, %p126
      %p128 = scmp.ne.s32.totalorder %s117, %s120
      %p129 = scmp.eq.s32.totalorder %s22, 1
      %p130 = por %p128, %p129
      %p131 = scmp.ne.s32.totalorder %s120, %s121
      %p132 = scmp.eq.s32.totalorder %s22, 0
      %p133 = por %p131, %p132
      %p134 = scmp.ne.s32.totalorder %s120, %s121
      %p135 = scmp.eq.s32.totalorder %s23, 1
      %p136 = por %p134, %p135
      %p138 = scmp.ne.s32.totalorder %s121, %s137
      %p139 = scmp.eq.s32.totalorder %s23, 0
      %p140 = por %p138, %p139
      %s142 = sadd.s32 %s141, 1
      %p145 = scmp.eq.s32.totalorder %s17, 1
      %p146 = scmp.ne.s32.totalorder %s141, %s143
      %p147 = scmp.eq.s32.totalorder %s17, 0
      %p148 = por %p146, %p147
      %p149 = scmp.ne.s32.totalorder %s141, %s143
      %p150 = scmp.eq.s32.totalorder %s22, 1
      %p151 = por %p149, %p150
      %p152 = scmp.ne.s32.totalorder %s143, %s144
      %p153 = scmp.eq.s32.totalorder %s22, 0
      %p154 = por %p152, %p153
      %p155 = scmp.ne.s32.totalorder %s143, %s144
      %p156 = scmp.eq.s32.totalorder %s23, 1
      %p157 = por %p155, %p156
      %p159 = scmp.ne.s32.totalorder %s144, %s158
      %p160 = scmp.eq.s32.totalorder %s23, 0
      %p161 = por %p159, %p160
      %s162 = ssub.s32 %s24, %s36
      %p163 = scmp.eq.s32.totalorder %s162, 0
      %s165 = sadd.s32 %s164, 1
      %s166 = scalar_select %p163, %s164, %s165
      %p169 = pneg %p163
      %p170 = scmp.eq.s32.totalorder %s17, 1
      %p171 = por %p169, %p170
      %p172 = scmp.ne.s32.totalorder %s164, %s167
      %p173 = scmp.eq.s32.totalorder %s17, 0
      %p174 = por %p172, %p173
      %p175 = scmp.ne.s32.totalorder %s164, %s167
      %p176 = scmp.eq.s32.totalorder %s22, 1
      %p177 = por %p175, %p176
      %p178 = scmp.ne.s32.totalorder %s167, %s168
      %p179 = scmp.eq.s32.totalorder %s22, 0
      %p180 = por %p178, %p179
      %p181 = scmp.ne.s32.totalorder %s167, %s168
      %p182 = scmp.eq.s32.totalorder %s23, 1
      %p183 = por %p181, %p182
      %p185 = scmp.ne.s32.totalorder %s168, %s184
      %p186 = scmp.eq.s32.totalorder %s23, 0
      %p187 = por %p185, %p186
      %p188 = scmp.le.s32.totalorder 1, %s17
      %p189 = scmp.lt.s32.totalorder %s17, 3
      %p190 = pnand %p188, %p189
      %p191 = pneg %p190
      // Predicated region
      $region9: #{tpu_custom_call.1} parent=5 // pred_check
        _
      $region10: #{tpu_custom_call.1} parent=5 // pred_check_branch
        %193 = sbr.rel (%p190) target = $region12
      $region11: #{tpu_custom_call.1} parent=5 // pred_region
        %s194 = ssub.s32 %s17, 1
        // Predicated region
        $region13: #{tpu_custom_call.1} parent=11 // pred_check
          %p195 = pneg %p81
        $region14: #{tpu_custom_call.1} parent=11 // pred_check_branch
          %197 = sbr.rel (%p195) target = $region16
        $region15: #{tpu_custom_call.1} parent=11 // pred_region
          %199 = vsyncadd [#allocation7], 0
          %s200 = smul.addr %s27, 4
          %s201 = scalar_lea.hbm %s1, %s200
          %s202 = sshll.u32 %s201, 4
          %s203 = int_to_ptr.hbm [resolvable:$true] %s202
          %s204 = sshll.u32 [#allocation6], 4
          %s205 = int_to_ptr.vmem [resolvable:$true] %s204
          %210 = dma.hbm_to_vmem [thread:$0]  %s203, 2048, %s205, [#allocation7], 64, 64, 4
        $region16: #{tpu_custom_call.1} parent=11 // pred_fallthru
          _
        // Predicated region
        $region17: #{tpu_custom_call.1} parent=11 // pred_check
          %p211 = pneg %p107
        $region18: #{tpu_custom_call.1} parent=11 // pred_check_branch
          %213 = sbr.rel (%p211) target = $region20
        $region19: #{tpu_custom_call.1} parent=11 // pred_region
          %p214 = scmp.lt.s32.totalorder %s27, 0
          %s215 = scalar_select %p214, %s27, 0
          %s216 = scalar_lea.vmem %s2, %s215
        $region20: #{tpu_custom_call.1} parent=11 // pred_fallthru
          _
        // Predicated region
        $region21: #{tpu_custom_call.1} parent=11 // pred_check
          %p217 = pneg %p133
        $region22: #{tpu_custom_call.1} parent=11 // pred_check_branch
          %219 = sbr.rel (%p217) target = $region24
        $region23: #{tpu_custom_call.1} parent=11 // pred_region
          %p220 = scmp.lt.s32.totalorder %s27, 0
          %s221 = scalar_select %p220, %s27, 0
          %s222 = scalar_lea.vmem %s3, %s221
        $region24: #{tpu_custom_call.1} parent=11 // pred_fallthru
          _
        // Predicated region
        $region25: #{tpu_custom_call.1} parent=11 // pred_check
          %p223 = pneg %p154
        $region26: #{tpu_custom_call.1} parent=11 // pred_check_branch
          %225 = sbr.rel (%p223) target = $region28
        $region27: #{tpu_custom_call.1} parent=11 // pred_region
          _
        $region28: #{tpu_custom_call.1} parent=11 // pred_fallthru
          _
      $region12: #{tpu_custom_call.1} parent=5 // pred_fallthru
        _
      %p226 = scmp.lt.s32.totalorder %s17, 2
      // Predicated region
      $region29: #{tpu_custom_call.1} parent=5 // pred_check
        %p227 = pneg %p226
      $region30: #{tpu_custom_call.1} parent=5 // pred_check_branch
        %229 = sbr.rel (%p227) target = $region32
      $region31: #{tpu_custom_call.1} parent=5 // pred_region
        // Predicated region
        $region33: #{tpu_custom_call.1} parent=31 // pred_check
          %p230 = pneg %p49
        $region34: #{tpu_custom_call.1} parent=31 // pred_check_branch
          %232 = sbr.rel (%p230) target = $region36
        $region35: #{tpu_custom_call.1} parent=31 // pred_region
          %s233 = sand.u32 %s39, 1
          %s234 = scalar_lea.sflag [#allocation5], %s233
          %s235 = sand.u32 %s39, 1
          %s236 = smul.addr %s235, 16
          %s237 = scalar_lea.vmem [#allocation4], %s236
          %239 = vsyncadd %s234, 0
          %s240 = smul.addr %s24, 2
          %s241 = smul.addr %s240, 8
          %s242 = scalar_lea.hbm %s0, %s241
          %s244 = sshll.u32 %s242, 4
          %s245 = int_to_ptr.hbm [resolvable:$true] %s244
          %s246 = sshll.u32 %s237, 4
          %s247 = int_to_ptr.vmem [resolvable:$true] %s246
          %249 = dma.hbm_to_vmem [thread:$0]  %s245, 256, %s247, %s234
        $region36: #{tpu_custom_call.1} parent=31 // pred_fallthru
          _
      $region32: #{tpu_custom_call.1} parent=5 // pred_fallthru
        _
      %p250 = scmp.le.s32.totalorder 1, %s17
      %p251 = scmp.lt.s32.totalorder %s17, 3
      %p252 = pnand %p250, %p251
      %p253 = pneg %p252
      // Predicated region
      $region37: #{tpu_custom_call.1} parent=5 // pred_check
        _
      $region38: #{tpu_custom_call.1} parent=5 // pred_check_branch
        %255 = sbr.rel (%p252) target = $region40
      $region39: #{tpu_custom_call.1} parent=5 // pred_region
        %s256 = ssub.s32 %s17, 1
        %s257 = sand.u32 %s42, 1
        %s258 = scalar_lea.sflag [#allocation5], %s257
        %s259 = sand.u32 %s42, 1
        %s260 = smul.addr %s259, 16
        %s261 = scalar_lea.vmem [#allocation4], %s260
        // Predicated region
        $region41: #{tpu_custom_call.1} parent=39 // pred_check
          %p262 = pneg %p55
        $region42: #{tpu_custom_call.1} parent=39 // pred_check_branch
          %264 = sbr.rel (%p262) target = $region44
        $region43: #{tpu_custom_call.1} parent=39 // pred_region
          %266 = dma.done %s258, 256
        $region44: #{tpu_custom_call.1} parent=39 // pred_fallthru
          _
        // Predicated region
        $region45: #{tpu_custom_call.1} parent=39 // pred_check
          %p267 = pneg %p81
        $region46: #{tpu_custom_call.1} parent=39 // pred_check_branch
          %269 = sbr.rel (%p267) target = $region48
        $region47: #{tpu_custom_call.1} parent=39 // pred_region
          %271 = dma.done [#allocation7], 2048
        $region48: #{tpu_custom_call.1} parent=39 // pred_fallthru
          _
        %s272 = sand.u32 %s42, 1
        %s273 = scalar_lea.sflag [#allocation5], %s272
        %s274 = sand.u32 %s42, 1
        %s275 = smul.addr %s274, 16
        %s276 = scalar_lea.vmem [#allocation4], %s275
        %p277 = pneg %p55
        %p278 = pneg %p52
        %p279 = pneg %p81
        %p280 = pneg %p78
        %p281 = scmp.lt.s32.totalorder %s27, 0
        %s282 = scalar_select %p281, %s27, 0
        %s283 = scalar_lea.vmem %s2, %s282
        %p284 = pneg %p107
        %p285 = pneg %p104
        %p286 = scmp.lt.s32.totalorder %s27, 0
        %s287 = scalar_select %p286, %s27, 0
        %s288 = scalar_lea.vmem %s3, %s287
        %p289 = pneg %p133
        %p290 = pneg %p130
        %p291 = pneg %p154
        %p292 = pneg %p151
        %p293 = pneg %p180
        %p294 = pneg %p177
        %p295 = scmp.lt.s32.totalorder %s26, 1
        %s296 = scalar_select %p295, %s26, 1
        %s297 = smul.addr %s296, 8
        %s298 = scalar_lea.vmem %s5, %s297
        %p299 = scmp.lt.s32.totalorder %s27, 0
        %s300 = scalar_select %p299, %s27, 0
        %s301 = scalar_lea.vmem %s2, %s300
        %p302 = scmp.lt.s32.totalorder %s27, 0
        %s303 = scalar_select %p302, %s27, 0
        %s304 = scalar_lea.vmem %s3, %s303
        %p305 = scmp.lt.s32.totalorder %s26, 1
        %s306 = scalar_select %p305, %s26, 1
        %s307 = smul.addr %s306, 8
        %s308 = scalar_lea.vmem %s5, %s307
        %p309 = scmp.eq.s32.totalorder %s27, 0
        // Predicated region
        $region49: #{tpu_custom_call.1} parent=39 // pred_check
          %p310 = pneg %p309
        $region50: #{tpu_custom_call.1} parent=39 // pred_check_branch
          %312 = sbr.rel (%p310) target = $region52
        $region51: #{tpu_custom_call.1} parent=39 // pred_region
          %v313 = vld [vmem:[#allocation3] sm:$0x1]
          %v315 = vperm.slane %v313, 0
          %vm317 = vcmask 7168
          %318 = vst.msk [vmem:[#allocation2] sm:$0xff] %vm317, %v315
        $region52: #{tpu_custom_call.1} parent=39 // pred_fallthru
          _
        %v319 = vld [vmem:[%s261] sm:$0xff]
        %v320 = vld [vmem:[%s261 + $0x8] sm:$0xff]
        %v321 = vpack.c.bf16 %v319, %v319
        %v322 = vpack.c.bf16 %v320, %v320
        %v323 = vld [vmem:[#allocation6] sm:$0xf]
        %v324 = vld [vmem:[#allocation6 + $0x4] sm:$0xf]
        %v325 = vld [vmem:[#allocation6 + $0x8] sm:$0xf]
        %v326 = vld [vmem:[#allocation6 + $0xc] sm:$0xf]
        %v327 = vld [vmem:[#allocation6 + $0x10] sm:$0xf]
        %v328 = vld [vmem:[#allocation6 + $0x14] sm:$0xf]
        %v329 = vld [vmem:[#allocation6 + $0x18] sm:$0xf]
        %v330 = vld [vmem:[#allocation6 + $0x1c] sm:$0xf]
        %v331 = vld [vmem:[#allocation6 + $0x20] sm:$0xf]
        %v332 = vld [vmem:[#allocation6 + $0x24] sm:$0xf]
        %v333 = vld [vmem:[#allocation6 + $0x28] sm:$0xf]
        %v334 = vld [vmem:[#allocation6 + $0x2c] sm:$0xf]
        %v335 = vld [vmem:[#allocation6 + $0x30] sm:$0xf]
        %v336 = vld [vmem:[#allocation6 + $0x34] sm:$0xf]
        %v337 = vld [vmem:[#allocation6 + $0x38] sm:$0xf]
        %v338 = vld [vmem:[#allocation6 + $0x3c] sm:$0xf]
        %v339 = vld [vmem:[#allocation6 + $0x40] sm:$0xf]
        %v340 = vld [vmem:[#allocation6 + $0x44] sm:$0xf]
        %v341 = vld [vmem:[#allocation6 + $0x48] sm:$0xf]
        %v342 = vld [vmem:[#allocation6 + $0x4c] sm:$0xf]
        %v343 = vld [vmem:[#allocation6 + $0x50] sm:$0xf]
        %v344 = vld [vmem:[#allocation6 + $0x54] sm:$0xf]
        %v345 = vld [vmem:[#allocation6 + $0x58] sm:$0xf]
        %v346 = vld [vmem:[#allocation6 + $0x5c] sm:$0xf]
        %v347 = vld [vmem:[#allocation6 + $0x60] sm:$0xf]
        %v348 = vld [vmem:[#allocation6 + $0x64] sm:$0xf]
        %v349 = vld [vmem:[#allocation6 + $0x68] sm:$0xf]
        %v350 = vld [vmem:[#allocation6 + $0x6c] sm:$0xf]
        %v351 = vld [vmem:[#allocation6 + $0x70] sm:$0xf]
        %v352 = vld [vmem:[#allocation6 + $0x74] sm:$0xf]
        %v353 = vld [vmem:[#allocation6 + $0x78] sm:$0xf]
        %v354 = vld [vmem:[#allocation6 + $0x7c] sm:$0xf]
        %v355 = vld [vmem:[%s301] sm:$0x1]
        %v357 = vperm.slane %v355, 0
        %v391 = vunpack.c.l.b16 %v323
        %v392 = vunpack.c.l.b16 %v324
        %v393 = vunpack.c.l.b16 %v325
        %v394 = vunpack.c.l.b16 %v326
        %v395 = vunpack.c.l.b16 %v327
        %v396 = vunpack.c.l.b16 %v328
        %v397 = vunpack.c.l.b16 %v329
        %v398 = vunpack.c.l.b16 %v330
        %v399 = vunpack.c.l.b16 %v331
        %v400 = vunpack.c.l.b16 %v332
        %v401 = vunpack.c.l.b16 %v333
        %v402 = vunpack.c.l.b16 %v334
        %v403 = vunpack.c.l.b16 %v335
        %v404 = vunpack.c.l.b16 %v336
        %v405 = vunpack.c.l.b16 %v337
        %v406 = vunpack.c.l.b16 %v338
        %v407 = vunpack.c.l.b16 %v339
        %v408 = vunpack.c.l.b16 %v340
        %v409 = vunpack.c.l.b16 %v341
        %v410 = vunpack.c.l.b16 %v342
        %v411 = vunpack.c.l.b16 %v343
        %v412 = vunpack.c.l.b16 %v344
        %v413 = vunpack.c.l.b16 %v345
        %v414 = vunpack.c.l.b16 %v346
        %v415 = vunpack.c.l.b16 %v347
        %v416 = vunpack.c.l.b16 %v348
        %v417 = vunpack.c.l.b16 %v349
        %v418 = vunpack.c.l.b16 %v350
        %v419 = vunpack.c.l.b16 %v351
        %v420 = vunpack.c.l.b16 %v352
        %v421 = vunpack.c.l.b16 %v353
        %v422 = vunpack.c.l.b16 %v354
        %v423 = vpack.c.b16 %v392, %v391
        %v424 = vpack.c.b16 %v394, %v393
        %v425 = vpack.c.b16 %v396, %v395
        %v426 = vpack.c.b16 %v398, %v397
        %v427 = vpack.c.b16 %v400, %v399
        %v428 = vpack.c.b16 %v402, %v401
        %v429 = vpack.c.b16 %v404, %v403
        %v430 = vpack.c.b16 %v406, %v405
        %v431 = vpack.c.b16 %v408, %v407
        %v432 = vpack.c.b16 %v410, %v409
        %v433 = vpack.c.b16 %v412, %v411
        %v434 = vpack.c.b16 %v414, %v413
        %v435 = vpack.c.b16 %v416, %v415
        %v436 = vpack.c.b16 %v418, %v417
        %v437 = vpack.c.b16 %v420, %v419
        %v438 = vpack.c.b16 %v422, %v421
        %455 = vmatpush.bf16.msra.mxu0 %v430
        %456 = vmatpush.bf16.msra.mxu0 %v429
        %457 = vmatpush.bf16.msra.mxu0 %v428
        %458 = vmatpush.bf16.msra.mxu0 %v427
        %459 = vmatpush.bf16.msra.mxu0 %v426
        %460 = vmatpush.bf16.msra.mxu0 %v425
        %461 = vmatpush.bf16.msra.mxu0 %v424
        %462 = vmatpush.bf16.msra.mxu0 %v423
        %463 = vmatmul.bf16.gmra.mxu0 %v321
        %v464 = vpop.f32.mrf.mxu0
        %v465 = vadd.f32 %v357, %v464
        %v466 = vpop.f32.mrf.mxu0
        %467 = vdwg.mxu0
        %468 = vmatpush.bf16.msra.mxu0 %v438
        %469 = vmatpush.bf16.msra.mxu0 %v437
        %470 = vmatpush.bf16.msra.mxu0 %v436
        %471 = vmatpush.bf16.msra.mxu0 %v435
        %472 = vmatpush.bf16.msra.mxu0 %v434
        %473 = vmatpush.bf16.msra.mxu0 %v433
        %474 = vmatpush.bf16.msra.mxu0 %v432
        %475 = vmatpush.bf16.msra.mxu0 %v431
        %476 = vmatmul.bf16.gmra.mxu0 %v322
        %v477 = vpop.f32.mrf.mxu0
        %v478 = vadd.f32 %v465, %v477
        %v479 = vpop.f32.mrf.mxu0
        %480 = vdwg.mxu0
        %v481 = vmax.f32 %v478, 0.0
        %v482 = vld [vmem:[#allocation2] sm:$0xff]
        %v483 = vld [vmem:[%s304] sm:$0x1]
        %v485 = vperm.slane %v483, 0
        %v487 = vmul.f32 %v481, %v485
        %488 = vadd.xlane.f32.xlu0 %v487
        %v489 = vpop.xlane.xlu0 %488
        %v490 = vadd.f32 %v482, %v489
        %vm491 = vcmask 7168
        %492 = vst.msk [vmem:[#allocation2] sm:$0xff] %vm491, %v490
        // Predicated region
        $region53: #{tpu_custom_call.1} parent=39 // pred_check
          %p493 = pneg %p309
        $region54: #{tpu_custom_call.1} parent=39 // pred_check_branch
          %495 = sbr.rel (%p493) target = $region56
        $region55: #{tpu_custom_call.1} parent=39 // pred_region
          %v496 = vld [vmem:[#allocation2] sm:$0xff]
          %497 = vst.msk [vmem:[%s308] sm:$0xff] %vm491, %v496
        $region56: #{tpu_custom_call.1} parent=39 // pred_fallthru
          _
        %p498 = scmp.lt.s32.totalorder %s26, 1
        %s499 = scalar_select %p498, %s26, 1
        %s500 = smul.addr %s499, 8
        %s501 = scalar_lea.vmem %s5, %s500
        // Predicated region
        $region57: #{tpu_custom_call.1} parent=39 // pred_check
          %p502 = pneg %p177
        $region58: #{tpu_custom_call.1} parent=39 // pred_check_branch
          %504 = sbr.rel (%p502) target = $region60
        $region59: #{tpu_custom_call.1} parent=39 // pred_region
          _
        $region60: #{tpu_custom_call.1} parent=39 // pred_fallthru
          _
      $region40: #{tpu_custom_call.1} parent=5 // pred_fallthru
        _
      %p505 = scmp.le.s32.totalorder 2, %s17
      // Predicated region
      $region61: #{tpu_custom_call.1} parent=5 // pred_check
        %p506 = pneg %p505
      $region62: #{tpu_custom_call.1} parent=5 // pred_check_branch
        %508 = sbr.rel (%p506) target = $region64
      $region63: #{tpu_custom_call.1} parent=5 // pred_region
        %s509 = ssub.s32 %s17, 2
        // Predicated region
        $region65: #{tpu_custom_call.1} parent=63 // pred_check
          %p510 = pneg %p183
        $region66: #{tpu_custom_call.1} parent=63 // pred_check_branch
          %512 = sbr.rel (%p510) target = $region68
        $region67: #{tpu_custom_call.1} parent=63 // pred_region
          %p513 = scmp.lt.s32.totalorder %s28, 1
          %s514 = scalar_select %p513, %s28, 1
          %s515 = smul.addr %s514, 8
          %s516 = scalar_lea.vmem %s5, %s515
        $region68: #{tpu_custom_call.1} parent=63 // pred_fallthru
          _
      $region64: #{tpu_custom_call.1} parent=5 // pred_fallthru
        _
    $region6: #{tpu_custom_call.1} parent=1 // loop_footer
      %s21 = sadd.s32 1, %s17
    $region7: #{tpu_custom_call.1} parent=1 // loop_footer_branch
      %16 = sbr.rel target = $region3
    $region8: #{tpu_custom_call.1} parent=1 // loop_exit
      _
    %517 = vsyncpa [#allocation5], 1
    %s518 = scalar_lea.sflag [#allocation5], 1
    %519 = vsyncpa %s518, 1
    %520 = vsyncpa [#allocation7], 1

</llo_original>
